<compile_context>
chip_gen: v7x
topology: tpu7x:2x2x1
jax: 0.10.0
libtpu: 0.0.40
codegen_flags: <defaults>
</compile_context>

<pallas_src>
import jax
import jax.numpy as jnp
from jax.experimental import pallas as pl
from jax.experimental.pallas import tpu as pltpu


def _expand_kernel(x_ref, o_ref):
    # x_ref: (bn, 1, TILE) single-channel spatial tile(s)
    # o_ref: (bn, C, TILE) all output channels for the same tile(s)
    o_ref[...] = jnp.broadcast_to(x_ref[...], o_ref.shape)


def _round_up(v: int, m: int) -> int:
    return ((v + m - 1) // m) * m


def expand_channels(x: jax.Array, out_channels: int = 3) -> jax.Array:
    """Expand a (N, 1, H, W) array to (N, out_channels, H, W) via broadcast copy."""
    assert x.ndim == 4 and x.shape[1] == 1, "expected NCHW input with C==1"
    n, _, h, w = x.shape
    c = out_channels
    hw = h * w
    itemsize = jnp.dtype(x.dtype).itemsize

    # Lane-dense flattened layout: (N, 1, H*W) -> (N, C, H*W).
    x_flat = x.reshape(n, 1, hw)

    # ~4 MiB output blocks: on the measured HBM roofline plateau, and the
    # double-buffered in+out footprint (~2*(1+1/C)*block ~= 11 MiB) still fits
    # v5e's 16 MiB default scoped VMEM.
    target_out_bytes = 4 << 20
    sample_out_bytes = c * hw * itemsize

    if sample_out_bytes >= target_out_bytes and hw > 128:
        # Big spatial extent: tile H*W within a single sample.
        bn = 1
        tile = max(128, (target_out_bytes // (c * itemsize)) // 128 * 128)
        if tile >= hw:
            tile = hw  # full-extent block (no 128-multiple requirement then)
    else:
        # Small sample: take the whole spatial extent and batch samples.
        tile = hw
        bn = max(1, target_out_bytes // max(sample_out_bytes, 1))
        bn = min(bn, n)

    grid_n = pl.cdiv(n, bn)
    grid_t = pl.cdiv(hw, tile)

    # v7x has 2 TensorCores sharing HBM: make sure the parallel grid has at
    # least 2 steps when the problem allows it (no-op cost on v5e/v6e).
    if grid_n * grid_t < 2:
        if n >= 2:
            bn = (n + 1) // 2
            grid_n = pl.cdiv(n, bn)
        elif hw > 128:
            tile = _round_up(pl.cdiv(hw, 2), 128)  # multiple of 128, < hw
            grid_t = pl.cdiv(hw, tile)

    in_block_bytes = bn * 1 * tile * itemsize
    out_block_bytes = bn * c * tile * itemsize
    # Double-buffered footprint with ~2x headroom, capped well under physical
    # VMEM on every generation (64 MiB on v7x).
    vmem_limit = min(max(4 * (in_block_bytes + out_block_bytes), 16 << 20), 48 << 20)

    out_flat = pl.pallas_call(
        _expand_kernel,
        out_shape=jax.ShapeDtypeStruct((n, c, hw), x.dtype),
        grid_spec=pltpu.PrefetchScalarGridSpec(
            num_scalar_prefetch=0,
            grid=(grid_n, grid_t),
            in_specs=[
                # every spatial tile of the single input channel, bn samples at a time
                pl.BlockSpec((bn, 1, tile), lambda ni, ti: (ni, 0, ti)),
            ],
            # write all C channels of that tile in one go (lane-dense store)
            out_specs=pl.BlockSpec((bn, c, tile), lambda ni, ti: (ni, 0, ti)),
        ),
        compiler_params=pltpu.CompilerParams(
            dimension_semantics=("parallel", "parallel"),
            vmem_limit_bytes=vmem_limit,
        ),
        cost_estimate=pl.CostEstimate(
            flops=0,
            transcendentals=0,
            bytes_accessed=(1 + c) * n * hw * itemsize,
        ),
    )(x_flat)

    return out_flat.reshape(n, c, h, w)


if __name__ == "__main__":
    key = jax.random.PRNGKey(0)
    # small NCHW input consistent with the module: batch=2, single channel, 16x16
    x = jax.random.normal(key, (2, 1, 16, 16), dtype=jnp.float32)

    out = expand_channels(x, out_channels=3)
    out = jax.block_until_ready(out)

    # correctness check against plain-JAX broadcast (torch .expand semantics)
    ref = jnp.broadcast_to(x, (2, 3, 16, 16))
    assert out.shape == (2, 3, 16, 16)
    assert out.dtype == x.dtype
    assert jnp.array_equal(out, ref)

    print("KERNEL_OK")
</pallas_src>

<mosaic_0001>
module attributes {stable_mosaic.version = 11 : i64} {
  func.func @_expand_kernel(%arg0: i32, %arg1: i32, %arg2: memref<1x1x256xf32, #tpu.memory_space<vmem>>, %arg3: memref<1x3x256xf32, #tpu.memory_space<vmem>>) attributes {dimension_semantics = [#tpu.dimension_semantics<parallel>, #tpu.dimension_semantics<parallel>], iteration_bounds = array<i64: 2, 1>, scalar_prefetch = 0 : i64, scratch_operands = 0 : i64, tpu.core_type = #tpu.core_type<tc>, window_params = [{transform_indices = @transform_0, window_bounds = array<i64: 1, 1, 256>}, {transform_indices = @transform_1, window_bounds = array<i64: 1, 3, 256>}]} {
    %c0 = arith.constant 0 : index
    %c0_0 = arith.constant 0 : index
    %c0_1 = arith.constant 0 : index
    %0 = vector.load %arg2[%c0, %c0_0, %c0_1] : memref<1x1x256xf32, #tpu.memory_space<vmem>>, vector<1x1x256xf32>
    %1 = vector.shape_cast %0 : vector<1x1x256xf32> to vector<1x1x256xf32>
    %2 = vector.broadcast %1 : vector<1x1x256xf32> to vector<1x3x256xf32>
    %c0_2 = arith.constant 0 : index
    %c0_3 = arith.constant 0 : index
    %c0_4 = arith.constant 0 : index
    %3 = vector.load %arg3[%c0_2, %c0_3, %c0_4] : memref<1x3x256xf32, #tpu.memory_space<vmem>>, vector<1x3x256xf32>
    tpu.vector_store %arg3[%c0_2, %c0_3, %c0_4], %2 {strides = array<i32>} : memref<1x3x256xf32, #tpu.memory_space<vmem>>, vector<1x3x256xf32>,
    return
  }
  func.func @transform_0(%arg0: i32, %arg1: i32) -> (i32, i32, i32) {
    %c0_i32 = arith.constant 0 : i32
    %c0_i32_0 = arith.constant 0 : i32
    return %arg0, %c0_i32, %arg1 : i32, i32, i32
  }
  func.func @transform_1(%arg0: i32, %arg1: i32) -> (i32, i32, i32) {
    %c0_i32 = arith.constant 0 : i32
    %c0_i32_0 = arith.constant 0 : i32
    return %arg0, %c0_i32, %arg1 : i32, i32, i32
  }
}

</mosaic_0001>

<llo_original>
// kernel: tpu_custom_call.1
$region0: #{tpu_custom_call.1}
  #allocation0 [shape = 'u32[]', space=smem, size = 0x4, offset = 0x4, fixed_abs, tag = 'smem constant byte address 0x4 - core index']
  #allocation1 [shape = 'u32[144,128]{1,0:T(1,128)}', space=vmem, size = 0x12000, scoped, tag = 'internal scratch']
  %s0 = inlined_call_operand.hbm [shape: f32[2,1,256], index: 0, kind: input, shape index: {}]
  %s1 = inlined_call_operand.vmem [shape: f32[2,3,256], index: 1, kind: output, shape index: {}]
  %s2 = sld [smem:[#allocation0]]
  $region41: #{tpu_custom_call.1} parent=0
    _
  %s4 = ssub.s32 1, %s2
  %s5 = scalar_select 0, %s4, %s2
  $region1: #{tpu_custom_call.1} parent=0
    #allocation2 [shape = 'u8[2048]{0}', space=vmem, size = 0x800, scoped, tag = 'input window, operand 0']
    #allocation3 [shape = 's32[2]{0}', space=sflag, size = 0x8, scoped, tag = 'scoped memory for tpu_custom_call.1']
    %6 = vsyncpa [#allocation3], 0
    %s7 = scalar_lea.sflag [#allocation3], 1
    %8 = vsyncpa %s7, 0
    loop: start=0, step=1, limit=4
    $region2: #{tpu_custom_call.1} parent=1 // loop_pre_header
      _
    $region3: #{tpu_custom_call.1} parent=1 // loop_header
      %s10 = sphi 0, %s14
      %p11 = scmp.ge.s32.totalorder %s10, 4
      %s17 = sphi 0, %s29
      %s18 = sphi 0, %s25
      %s19 = sphi 0, %s17
      %s20 = sphi 0, %s18
      %s21 = sphi 0, %s19
      %s22 = sphi 0, %s20
      %s34 = sphi 0, %s36
      %s37 = sphi 0, %s34
      %s38 = sphi 0, %s37
      %s54 = sphi 0, %s38
      %s62 = sphi 0, %s64
      %s65 = sphi 0, %s62
      %s66 = sphi 0, %s65
      %s82 = sphi 0, %s66
    $region4: #{tpu_custom_call.1} parent=1 // loop_header_branch
      %13 = sbr.rel (%p11) target = $region8
    $region5: #{tpu_custom_call.1} parent=1 // loop_body
      %s15 = ssub.s32 %s10, 1
      %s16 = ssub.s32 %s10, 2
      %s23 = sadd.s32 1, %s18
      %p24 = scmp.ge.s32.totalorder %s23, 1
      %s25 = scalar_select %p24, 0, %s23
      %s26 = sadd.s32 1, %s17
      %s27 = scalar_select %p24, %s26, %s17
      %p28 = scmp.ge.s32.totalorder %s27, 2
      %s29 = scalar_select %p28, 0, %s27
      %s30 = ssub.s32 %s17, %s29
      %s31 = ssub.s32 %s18, %s25
      %s32 = sor.u32 %s30, %s31
      %p33 = scmp.eq.s32.totalorder %s32, 0
      %s35 = sadd.s32 %s34, 1
      %s36 = scalar_select %p33, %s34, %s35
      %p39 = pneg %p33
      %p40 = scmp.eq.s32.totalorder %s10, 1
      %p41 = por %p39, %p40
      %p42 = scmp.ne.s32.totalorder %s34, %s37
      %p43 = scmp.eq.s32.totalorder %s10, 0
      %p44 = por %p42, %p43
      %p45 = scmp.ne.s32.totalorder %s34, %s37
      %p46 = scmp.eq.s32.totalorder %s15, 1
      %p47 = por %p45, %p46
      %p48 = scmp.ne.s32.totalorder %s37, %s38
      %p49 = scmp.eq.s32.totalorder %s15, 0
      %p50 = por %p48, %p49
      %p51 = scmp.ne.s32.totalorder %s37, %s38
      %p52 = scmp.eq.s32.totalorder %s16, 1
      %p53 = por %p51, %p52
      %p55 = scmp.ne.s32.totalorder %s38, %s54
      %p56 = scmp.eq.s32.totalorder %s16, 0
      %p57 = por %p55, %p56
      %s58 = ssub.s32 %s17, %s29
      %s59 = ssub.s32 %s18, %s25
      %s60 = sor.u32 %s58, %s59
      %p61 = scmp.eq.s32.totalorder %s60, 0
      %s63 = sadd.s32 %s62, 1
      %s64 = scalar_select %p61, %s62, %s63
      %p67 = pneg %p61
      %p68 = scmp.eq.s32.totalorder %s10, 1
      %p69 = por %p67, %p68
      %p70 = scmp.ne.s32.totalorder %s62, %s65
      %p71 = scmp.eq.s32.totalorder %s10, 0
      %p72 = por %p70, %p71
      %p73 = scmp.ne.s32.totalorder %s62, %s65
      %p74 = scmp.eq.s32.totalorder %s15, 1
      %p75 = por %p73, %p74
      %p76 = scmp.ne.s32.totalorder %s65, %s66
      %p77 = scmp.eq.s32.totalorder %s15, 0
      %p78 = por %p76, %p77
      %p79 = scmp.ne.s32.totalorder %s65, %s66
      %p80 = scmp.eq.s32.totalorder %s16, 1
      %p81 = por %p79, %p80
      %p83 = scmp.ne.s32.totalorder %s66, %s82
      %p84 = scmp.eq.s32.totalorder %s16, 0
      %p85 = por %p83, %p84
      %p86 = scmp.le.s32.totalorder 1, %s10
      %p87 = scmp.lt.s32.totalorder %s10, 3
      %p88 = pnand %p86, %p87
      %p89 = pneg %p88
      // Predicated region
      $region9: #{tpu_custom_call.1} parent=5 // pred_check
        _
      $region10: #{tpu_custom_call.1} parent=5 // pred_check_branch
        %91 = sbr.rel (%p88) target = $region12
      $region11: #{tpu_custom_call.1} parent=5 // pred_region
        %s92 = ssub.s32 %s10, 1
      $region12: #{tpu_custom_call.1} parent=5 // pred_fallthru
        _
      %p93 = scmp.lt.s32.totalorder %s10, 2
      // Predicated region
      $region13: #{tpu_custom_call.1} parent=5 // pred_check
        %p94 = pneg %p93
      $region14: #{tpu_custom_call.1} parent=5 // pred_check_branch
        %96 = sbr.rel (%p94) target = $region16
      $region15: #{tpu_custom_call.1} parent=5 // pred_region
        // Predicated region
        $region17: #{tpu_custom_call.1} parent=15 // pred_check
          %p97 = pneg %p44
        $region18: #{tpu_custom_call.1} parent=15 // pred_check_branch
          %99 = sbr.rel (%p97) target = $region20
        $region19: #{tpu_custom_call.1} parent=15 // pred_region
          %s100 = sand.u32 %s34, 1
          %s101 = scalar_lea.sflag [#allocation3], %s100
          %s102 = sand.u32 %s34, 1
          %s103 = smul.addr %s102, 2
          %s104 = scalar_lea.vmem [#allocation2], %s103
          %s105 = smul.u32 2, %s18
          %s107 = ssub.s32 32, 32
          %108 = vsyncadd %s101, %s107
          %s109 = smul.addr %s17, 2
          %s110 = sadd.s32 %s105, %s109
          %s111 = smul.addr %s110, 16
          %s112 = scalar_lea.hbm %s0, %s111
          %s114 = sshll.u32 %s104, 4
          %s115 = int_to_ptr.vmem [resolvable:$true] %s114
          %117 = dma.hbm_to_vmem [thread:$0]  %s112, 32, %s115, %s101
        $region20: #{tpu_custom_call.1} parent=15 // pred_fallthru
          _
      $region16: #{tpu_custom_call.1} parent=5 // pred_fallthru
        _
      %p118 = scmp.le.s32.totalorder 1, %s10
      %p119 = scmp.lt.s32.totalorder %s10, 3
      %p120 = pnand %p118, %p119
      %p121 = pneg %p120
      // Predicated region
      $region21: #{tpu_custom_call.1} parent=5 // pred_check
        _
      $region22: #{tpu_custom_call.1} parent=5 // pred_check_branch
        %123 = sbr.rel (%p120) target = $region24
      $region23: #{tpu_custom_call.1} parent=5 // pred_region
        %s124 = ssub.s32 %s10, 1
        %s125 = sand.u32 %s37, 1
        %s126 = scalar_lea.sflag [#allocation3], %s125
        %s127 = sand.u32 %s37, 1
        %s128 = smul.addr %s127, 2
        %s129 = scalar_lea.vmem [#allocation2], %s128
        // Predicated region
        $region25: #{tpu_custom_call.1} parent=23 // pred_check
          %p130 = pneg %p50
        $region26: #{tpu_custom_call.1} parent=23 // pred_check_branch
          %132 = sbr.rel (%p130) target = $region28
        $region27: #{tpu_custom_call.1} parent=23 // pred_region
          %133 = dma.done %s126, 32
        $region28: #{tpu_custom_call.1} parent=23 // pred_fallthru
          _
        %s134 = sand.u32 %s37, 1
        %s135 = scalar_lea.sflag [#allocation3], %s134
        %s136 = sand.u32 %s37, 1
        %s137 = smul.addr %s136, 2
        %s138 = scalar_lea.vmem [#allocation2], %s137
        %p139 = pneg %p50
        %p140 = pneg %p47
        %p141 = pneg %p78
        %p142 = pneg %p75
        %s143 = smul.u32 2, %s20
        %p144 = scmp.lt.s32.totalorder %s19, 1
        %s145 = scalar_select %p144, %s19, 1
        %p146 = scmp.lt.s32.totalorder %s143, 1
        %s147 = scalar_select %p146, %s143, 1
        %s148 = smul.addr %s145, 2
        %s149 = sadd.s32 %s147, %s148
        %s150 = smul.addr %s149, 4
        %s151 = scalar_lea.vmem %s1, %s150
        %s152 = smul.u32 2, %s20
        %s153 = smul.u32 2, %s20
        %p154 = scmp.lt.s32.totalorder %s19, 1
        %s155 = scalar_select %p154, %s19, 1
        %p156 = scmp.lt.s32.totalorder %s153, 1
        %s157 = scalar_select %p156, %s153, 1
        %s158 = smul.addr %s155, 2
        %s159 = sadd.s32 %s157, %s158
        %s160 = smul.addr %s159, 4
        %s161 = scalar_lea.vmem %s1, %s160
        %s162 = smul.u32 2, %s20
        %v163 = vld [vmem:[%s129] sm:$0x3]
        %v165 = vlaneseq
        %v166 = vshrl.u32 %v165, 7
        %v167 = vsub.s32 0, %v166
        %v168 = vrot.slane %v163, %v167
        %v169 = vlaneseq
        %v170 = vshrl.u32 %v169, 7
        %v171 = vsub.s32 1, %v170
        %v172 = vrot.slane %v163, %v171
        %v173 = vcombine.low %v168, %v172
        %175 = vst [vmem:[%s161] sm:$0x77] %v173
        %s176 = smul.u32 2, %s20
        %p177 = scmp.lt.s32.totalorder %s19, 1
        %s178 = scalar_select %p177, %s19, 1
        %p179 = scmp.lt.s32.totalorder %s176, 1
        %s180 = scalar_select %p179, %s176, 1
        %s181 = smul.addr %s178, 2
        %s182 = sadd.s32 %s180, %s181
        %s183 = smul.addr %s182, 4
        %s184 = scalar_lea.vmem %s1, %s183
        // Predicated region
        $region29: #{tpu_custom_call.1} parent=23 // pred_check
          %p185 = pneg %p75
        $region30: #{tpu_custom_call.1} parent=23 // pred_check_branch
          %187 = sbr.rel (%p185) target = $region32
        $region31: #{tpu_custom_call.1} parent=23 // pred_region
          %s188 = smul.u32 2, %s20
        $region32: #{tpu_custom_call.1} parent=23 // pred_fallthru
          _
      $region24: #{tpu_custom_call.1} parent=5 // pred_fallthru
        _
      %p189 = scmp.le.s32.totalorder 2, %s10
      // Predicated region
      $region33: #{tpu_custom_call.1} parent=5 // pred_check
        %p190 = pneg %p189
      $region34: #{tpu_custom_call.1} parent=5 // pred_check_branch
        %192 = sbr.rel (%p190) target = $region36
      $region35: #{tpu_custom_call.1} parent=5 // pred_region
        %s193 = ssub.s32 %s10, 2
        // Predicated region
        $region37: #{tpu_custom_call.1} parent=35 // pred_check
          %p194 = pneg %p81
        $region38: #{tpu_custom_call.1} parent=35 // pred_check_branch
          %196 = sbr.rel (%p194) target = $region40
        $region39: #{tpu_custom_call.1} parent=35 // pred_region
          %s197 = smul.u32 2, %s22
          %p198 = scmp.lt.s32.totalorder %s21, 1
          %s199 = scalar_select %p198, %s21, 1
          %p200 = scmp.lt.s32.totalorder %s197, 1
          %s201 = scalar_select %p200, %s197, 1
          %s202 = smul.addr %s199, 2
          %s203 = sadd.s32 %s201, %s202
          %s204 = smul.addr %s203, 4
          %s205 = scalar_lea.vmem %s1, %s204
        $region40: #{tpu_custom_call.1} parent=35 // pred_fallthru
          _
      $region36: #{tpu_custom_call.1} parent=5 // pred_fallthru
        _
    $region6: #{tpu_custom_call.1} parent=1 // loop_footer
      %s14 = sadd.s32 1, %s10
    $region7: #{tpu_custom_call.1} parent=1 // loop_footer_branch
      %9 = sbr.rel target = $region3
    $region8: #{tpu_custom_call.1} parent=1 // loop_exit
      _
    %206 = vsyncpa [#allocation3], 1
    %s207 = scalar_lea.sflag [#allocation3], 1
    %208 = vsyncpa %s207, 1

</llo_original>
